<compile_context>
chip_gen: v7x
topology: tpu7x:2x2x1
jax: 0.10.0
libtpu: 0.0.40
codegen_flags: <defaults>
</compile_context>

<pallas_src>
import functools

import jax
import jax.numpy as jnp
from jax import lax
from jax.experimental import pallas as pl
from jax.experimental.pallas import tpu as pltpu


def _round_up(n, m):
    return ((n + m - 1) // m) * m


def _value_mlp_kernel(x_ref, w1_ref, b1_ref, w2_ref, b2_ref, w3_ref, b3_ref,
                      out_ref, *, act_dtype):
    # x: [TILE_B, D] (natural obs layout); weights PyTorch-native [out, in].
    x = x_ref[...]

    # Layer 1: Linear(D, 64) + Tanh.  Contract on D with the obs tile kept in
    # its [TILE_B, D] layout -> result is lane-dense [64, TILE_B].
    h = lax.dot_general(w1_ref[...], x, (((1,), (1,)), ((), ())),
                        preferred_element_type=jnp.float32)
    h = jnp.tanh((h + b1_ref[...]).astype(act_dtype)).astype(w2_ref.dtype)

    # Layer 2: Linear(64, 64) + Tanh          -> [64, TILE_B]
    h = jnp.dot(w2_ref[...], h, preferred_element_type=jnp.float32)
    h = jnp.tanh((h + b2_ref[...]).astype(act_dtype)).astype(w3_ref.dtype)

    # Layer 3: Linear(64, 1)                  -> [1, TILE_B] lane-dense store
    v = jnp.dot(w3_ref[...], h, preferred_element_type=jnp.float32)
    out_ref[...] = (v + b3_ref[0, 0]).astype(out_ref.dtype)


def value_forward(obs, params, *, tile_b=8192, tanh_dtype=None):
    """obs: [B, input_dim] -> value: [B, 1] float32.

    params are PyTorch-native: (w1[64,D], b1[64], w2[64,64], b2[64], w3[1,64], b3[1]).
    tanh_dtype: None (f32, safe everywhere / v5e) or jnp.bfloat16 (v6e/v7x EUP relief).
    """
    w1, b1, w2, b2, w3, b3 = params
    B, D = obs.shape
    H = w1.shape[0]

    # --- batch tile selection -------------------------------------------------
    # Keep double-buffered input tiles + [64, tb] f32 intermediates + resident
    # weights well under the smallest default scoped-VMEM budget.
    itemsize = jnp.dtype(obs.dtype).itemsize
    vmem_budget = 12 * 1024 * 1024
    fixed = 2 * 4 * (H * D + H * H + 3 * H + 1)          # resident weights/biases (x2 buf)
    per_elem = 2 * D * itemsize + 4 * H * 4 + 2 * 4       # input dbl-buf + intermediates + out
    tb_cap = max(128, ((vmem_budget - fixed) // per_elem) // 128 * 128)

    tb = _round_up(max(tile_b, 128), 128)
    tb = min(tb, tb_cap, _round_up(B, 128))
    n_tiles = pl.cdiv(B, tb)
    # Mid-size batch collapsing to a single tile would idle one v7x TensorCore.
    if n_tiles == 1 and B > 256:
        tb = min(tb, _round_up(pl.cdiv(B, 2), 128))
        n_tiles = pl.cdiv(B, tb)

    # --- operand prep (tiny arrays only; obs is passed through untouched) -----
    wdt = obs.dtype                                   # bf16 obs -> bf16 MXU inputs
    w1c = w1.astype(wdt)
    w2c = w2.astype(wdt)
    w3c = w3.astype(wdt)
    b1c = b1.astype(jnp.float32).reshape(H, 1)
    b2c = b2.astype(jnp.float32).reshape(H, 1)
    b3c = b3.astype(jnp.float32).reshape(1, 1)        # scalar -> SMEM

    act_dt = jnp.float32 if tanh_dtype is None else tanh_dtype
    kernel = functools.partial(_value_mlp_kernel, act_dtype=act_dt)

    out = pl.pallas_call(
        kernel,
        out_shape=jax.ShapeDtypeStruct((1, B), jnp.float32),
        grid=(n_tiles,),
        in_specs=[
            pl.BlockSpec((tb, D), lambda i: (i, 0)),      # obs tile [TILE_B, D]
            pl.BlockSpec((H, D), lambda i: (0, 0)),       # w1 (resident)
            pl.BlockSpec((H, 1), lambda i: (0, 0)),       # b1 (resident)
            pl.BlockSpec((H, H), lambda i: (0, 0)),       # w2 (resident)
            pl.BlockSpec((H, 1), lambda i: (0, 0)),       # b2 (resident)
            pl.BlockSpec((1, H), lambda i: (0, 0)),       # w3 (resident)
            pl.BlockSpec(memory_space=pltpu.MemorySpace.SMEM),  # b3 scalar
        ],
        out_specs=pl.BlockSpec((1, tb), lambda i: (0, i)),
        compiler_params=pltpu.CompilerParams(
            dimension_semantics=("parallel",)),           # batch tiles independent
    )(obs, w1c, b1c, w2c, b2c, w3c, b3c)

    return out.reshape(B, 1)


def init_value_params(key, input_dim, hidden=64):
    """Deterministic synthetic init, PyTorch-native shapes (W:[out,in], b:[out])."""
    ks = jax.random.split(key, 6)

    def lin(kw, kb, fan_in, fan_out):
        bound = 1.0 / jnp.sqrt(fan_in)
        w = jax.random.uniform(kw, (fan_out, fan_in), jnp.float32, -bound, bound)
        b = jax.random.uniform(kb, (fan_out,), jnp.float32, -bound, bound)
        return w, b

    w1, b1 = lin(ks[0], ks[1], input_dim, hidden)
    w2, b2 = lin(ks[2], ks[3], hidden, hidden)
    w3, b3 = lin(ks[4], ks[5], hidden, 1)
    return (w1, b1, w2, b2, w3, b3)


def value_forward_ref(obs, params):
    w1, b1, w2, b2, w3, b3 = params
    h1 = jnp.tanh(obs @ w1.T + b1)
    h2 = jnp.tanh(h1 @ w2.T + b2)
    return h2 @ w3.T + b3


if __name__ == "__main__":
    key = jax.random.PRNGKey(0)
    k_obs, k_obs2, k_params = jax.random.split(key, 3)

    batch, input_dim = 8, 32
    obs = jax.random.normal(k_obs, (batch, input_dim), jnp.float32)
    params = init_value_params(k_params, input_dim)
    ref = value_forward_ref(obs, params)

    # f32 path, single (ragged, OOB-masked) tile.
    out = jax.block_until_ready(value_forward(obs, params))
    assert out.shape == (batch, 1)
    assert jnp.allclose(out, ref, atol=1e-5, rtol=1e-5)

    # Multi-tile + ragged last tile path (exercises grid pipelining / megacore split).
    batch2 = 300
    obs2 = jax.random.normal(k_obs2, (batch2, input_dim), jnp.float32)
    ref2 = value_forward_ref(obs2, params)
    out2 = jax.block_until_ready(value_forward(obs2, params))
    assert out2.shape == (batch2, 1)
    assert jnp.allclose(out2, ref2, atol=1e-5, rtol=1e-5)

    # bf16-tanh path (recommended on v6e/v7x where the EUP binds before HBM);
    # tanh saturates, so the loose tolerance is comfortably met.
    out_bf16 = jax.block_until_ready(
        value_forward(obs, params, tanh_dtype=jnp.bfloat16))
    assert out_bf16.shape == (batch, 1)
    assert jnp.allclose(out_bf16, ref, atol=5e-2, rtol=5e-2)

    print("KERNEL_OK")
</pallas_src>

<mosaic_0001>
module attributes {stable_mosaic.version = 11 : i64} {
  func.func @_value_mlp_kernel(%arg0: i32, %arg1: memref<128x32xf32, #tpu.memory_space<vmem>>, %arg2: memref<64x32xf32, #tpu.memory_space<vmem>>, %arg3: memref<64x1xf32, #tpu.memory_space<vmem>>, %arg4: memref<64x64xf32, #tpu.memory_space<vmem>>, %arg5: memref<64x1xf32, #tpu.memory_space<vmem>>, %arg6: memref<1x64xf32, #tpu.memory_space<vmem>>, %arg7: memref<1x1xf32, #tpu.memory_space<smem>>, %arg8: memref<1x128xf32, #tpu.memory_space<vmem>>) attributes {dimension_semantics = [#tpu.dimension_semantics<parallel>], iteration_bounds = array<i64: 1>, scalar_prefetch = 0 : i64, scratch_operands = 0 : i64, tpu.core_type = #tpu.core_type<tc>, window_params = [{transform_indices = @transform_0, window_bounds = array<i64: 128, 32>}, {pipeline_mode = #tpu.pipeline_mode<synchronous>, transform_indices = @transform_1, window_bounds = array<i64: 64, 32>}, {pipeline_mode = #tpu.pipeline_mode<synchronous>, transform_indices = @transform_2, window_bounds = array<i64: 64, 1>}, {pipeline_mode = #tpu.pipeline_mode<synchronous>, transform_indices = @transform_3, window_bounds = array<i64: 64, 64>}, {pipeline_mode = #tpu.pipeline_mode<synchronous>, transform_indices = @transform_4, window_bounds = array<i64: 64, 1>}, {pipeline_mode = #tpu.pipeline_mode<synchronous>, transform_indices = @transform_5, window_bounds = array<i64: 1, 64>}, {transform_indices = @transform_6, window_bounds = array<i64: 1, 1>}, {transform_indices = @transform_7, window_bounds = array<i64: 1, 128>}]} {
    %c0 = arith.constant 0 : index
    %c0_0 = arith.constant 0 : index
    %0 = vector.load %arg1[%c0, %c0_0] : memref<128x32xf32, #tpu.memory_space<vmem>>, vector<128x32xf32>
    %c0_1 = arith.constant 0 : index
    %c0_2 = arith.constant 0 : index
    %1 = vector.load %arg2[%c0_1, %c0_2] : memref<64x32xf32, #tpu.memory_space<vmem>>, vector<64x32xf32>
    %cst = arith.constant dense<0.000000e+00> : vector<64x128xf32>
    %2 = tpu.matmul %1, %0, %cst {dimension_numbers = #tpu.dot_dimension_numbers<[1], [1], [0], [0], [0, 0, 1, 0], [], []>} : vector<64x32xf32>, vector<128x32xf32>, vector<64x128xf32> -> vector<64x128xf32>
    %c0_3 = arith.constant 0 : index
    %c0_4 = arith.constant 0 : index
    %3 = vector.load %arg3[%c0_3, %c0_4] : memref<64x1xf32, #tpu.memory_space<vmem>>, vector<64x1xf32>
    %4 = vector.broadcast %3 : vector<64x1xf32> to vector<64x128xf32>
    %5 = arith.addf %2, %4 : vector<64x128xf32>
    %6 = math.tanh %5 : vector<64x128xf32>
    %c0_5 = arith.constant 0 : index
    %c0_6 = arith.constant 0 : index
    %7 = vector.load %arg4[%c0_5, %c0_6] : memref<64x64xf32, #tpu.memory_space<vmem>>, vector<64x64xf32>
    %cst_7 = arith.constant dense<0.000000e+00> : vector<64x128xf32>
    %8 = tpu.matmul %7, %6, %cst_7 {dimension_numbers = #tpu.dot_dimension_numbers<[1], [0], [0], [1], [0, 0, 1, 1], [], []>} : vector<64x64xf32>, vector<64x128xf32>, vector<64x128xf32> -> vector<64x128xf32>
    %c0_8 = arith.constant 0 : index
    %c0_9 = arith.constant 0 : index
    %9 = vector.load %arg5[%c0_8, %c0_9] : memref<64x1xf32, #tpu.memory_space<vmem>>, vector<64x1xf32>
    %10 = vector.broadcast %9 : vector<64x1xf32> to vector<64x128xf32>
    %11 = arith.addf %8, %10 : vector<64x128xf32>
    %12 = math.tanh %11 : vector<64x128xf32>
    %c0_10 = arith.constant 0 : index
    %c0_11 = arith.constant 0 : index
    %13 = vector.load %arg6[%c0_10, %c0_11] : memref<1x64xf32, #tpu.memory_space<vmem>>, vector<1x64xf32>
    %cst_12 = arith.constant dense<0.000000e+00> : vector<1x128xf32>
    %14 = tpu.matmul %13, %12, %cst_12 {dimension_numbers = #tpu.dot_dimension_numbers<[1], [0], [0], [1], [0, 0, 1, 1], [], []>} : vector<1x64xf32>, vector<64x128xf32>, vector<1x128xf32> -> vector<1x128xf32>
    %c0_13 = arith.constant 0 : index
    %c0_14 = arith.constant 0 : index
    %15 = memref.load %arg7[%c0_13, %c0_14] : memref<1x1xf32, #tpu.memory_space<smem>>
    %16 = vector.broadcast %15 : f32 to vector<1x128xf32>
    %17 = arith.addf %14, %16 : vector<1x128xf32>
    %c0_15 = arith.constant 0 : index
    %c0_16 = arith.constant 0 : index
    %18 = vector.load %arg8[%c0_15, %c0_16] : memref<1x128xf32, #tpu.memory_space<vmem>>, vector<1x128xf32>
    tpu.vector_store %arg8[%c0_15, %c0_16], %17 {strides = array<i32>} : memref<1x128xf32, #tpu.memory_space<vmem>>, vector<1x128xf32>,
    return
  }
  func.func @transform_0(%arg0: i32) -> (i32, i32) {
    %c0_i32 = arith.constant 0 : i32
    %c0_i32_0 = arith.constant 0 : i32
    return %arg0, %c0_i32 : i32, i32
  }
  func.func @transform_1(%arg0: i32) -> (i32, i32) {
    %c0_i32 = arith.constant 0 : i32
    %c0_i32_0 = arith.constant 0 : i32
    %c0_i32_1 = arith.constant 0 : i32
    return %c0_i32, %c0_i32_0 : i32, i32
  }
  func.func @transform_2(%arg0: i32) -> (i32, i32) {
    %c0_i32 = arith.constant 0 : i32
    %c0_i32_0 = arith.constant 0 : i32
    %c0_i32_1 = arith.constant 0 : i32
    return %c0_i32, %c0_i32_0 : i32, i32
  }
  func.func @transform_3(%arg0: i32) -> (i32, i32) {
    %c0_i32 = arith.constant 0 : i32
    %c0_i32_0 = arith.constant 0 : i32
    %c0_i32_1 = arith.constant 0 : i32
    return %c0_i32, %c0_i32_0 : i32, i32
  }
  func.func @transform_4(%arg0: i32) -> (i32, i32) {
    %c0_i32 = arith.constant 0 : i32
    %c0_i32_0 = arith.constant 0 : i32
    %c0_i32_1 = arith.constant 0 : i32
    return %c0_i32, %c0_i32_0 : i32, i32
  }
  func.func @transform_5(%arg0: i32) -> (i32, i32) {
    %c0_i32 = arith.constant 0 : i32
    %c0_i32_0 = arith.constant 0 : i32
    %c0_i32_1 = arith.constant 0 : i32
    return %c0_i32, %c0_i32_0 : i32, i32
  }
  func.func @transform_6(%arg0: i32) -> (i32, i32) {
    %c0_i32 = arith.constant 0 : i32
    %c0_i32_0 = arith.constant 0 : i32
    %c0_i32_1 = arith.constant 0 : i32
    return %c0_i32, %c0_i32_0 : i32, i32
  }
  func.func @transform_7(%arg0: i32) -> (i32, i32) {
    %c0_i32 = arith.constant 0 : i32
    %c0_i32_0 = arith.constant 0 : i32
    return %c0_i32, %arg0 : i32, i32
  }
}

</mosaic_0001>

<llo_original>
// kernel: tpu_custom_call.1
$region0: #{tpu_custom_call.1}
  #allocation0 [shape = 'u32[]', space=smem, size = 0x4, offset = 0x4, fixed_abs, tag = 'smem constant byte address 0x4 - core index']
  #allocation1 [shape = 'u32[144,128]{1,0:T(1,128)}', space=vmem, size = 0x12000, scoped, tag = 'internal scratch']
  #allocation2 [shape = 'f32[1,1]{1,0:T(1,128)S(6)}', space=smem, size = 0x200, scoped, tag = 'scoped memory for tpu_custom_call.1']
  %s0 = inlined_call_operand.vmem [shape: f32[8,32], index: 0, kind: input, shape index: {}]
  %s1 = inlined_call_operand.vmem [shape: f32[64,32], index: 1, kind: input, shape index: {}]
  %s2 = inlined_call_operand.vmem [shape: f32[64,1], index: 2, kind: input, shape index: {}]
  %s3 = inlined_call_operand.vmem [shape: f32[64,64], index: 3, kind: input, shape index: {}]
  %s4 = inlined_call_operand.vmem [shape: f32[64,1], index: 4, kind: input, shape index: {}]
  %s5 = inlined_call_operand.vmem [shape: f32[1,64], index: 5, kind: input, shape index: {}]
  %s6 = inlined_call_operand.<no memory space> [shape: f32[1,1], index: 6, kind: input, shape index: {}]
  %s7 = inlined_call_operand.hbm [shape: f32[1,8], index: 7, kind: output, shape index: {}]
  %s8 = sld [smem:[#allocation0]]
  $region38: #{tpu_custom_call.1} parent=0
    _
  %s10 = ssub.s32 1, %s8
  %s11 = scalar_select 0, %s10, %s8
  %12 = sst [smem:[#allocation2]] %s6
  $region1: #{tpu_custom_call.1} parent=0
    #allocation3 [shape = 'u8[512]{0}', space=vmem, size = 0x400, scoped, tag = 'output window, operand 0, single buffered']
    #allocation4 [shape = 's32[1]{0}', space=sflag, size = 0x4, scoped, tag = 'scoped memory for tpu_custom_call.1']
    %13 = vsyncpa [#allocation4], 0
    // Predicated region
    $region2: #{tpu_custom_call.1} parent=1 // pred_check
      _
    $region3: #{tpu_custom_call.1} parent=1 // pred_check_branch
      %15 = sbr.rel (0) target = $region5
    $region4: #{tpu_custom_call.1} parent=1 // pred_region
      _
    $region5: #{tpu_custom_call.1} parent=1 // pred_fallthru
      _
    // Predicated region
    $region6: #{tpu_custom_call.1} parent=1 // pred_check
      _
    $region7: #{tpu_custom_call.1} parent=1 // pred_check_branch
      %17 = sbr.rel (0) target = $region9
    $region8: #{tpu_custom_call.1} parent=1 // pred_region
      _
    $region9: #{tpu_custom_call.1} parent=1 // pred_fallthru
      _
    // Predicated region
    $region10: #{tpu_custom_call.1} parent=1 // pred_check
      _
    $region11: #{tpu_custom_call.1} parent=1 // pred_check_branch
      %19 = sbr.rel (0) target = $region13
    $region12: #{tpu_custom_call.1} parent=1 // pred_region
      _
    $region13: #{tpu_custom_call.1} parent=1 // pred_fallthru
      _
    // Predicated region
    $region14: #{tpu_custom_call.1} parent=1 // pred_check
      _
    $region15: #{tpu_custom_call.1} parent=1 // pred_check_branch
      %21 = sbr.rel (0) target = $region17
    $region16: #{tpu_custom_call.1} parent=1 // pred_region
      _
    $region17: #{tpu_custom_call.1} parent=1 // pred_fallthru
      _
    // Predicated region
    $region18: #{tpu_custom_call.1} parent=1 // pred_check
      _
    $region19: #{tpu_custom_call.1} parent=1 // pred_check_branch
      %23 = sbr.rel (0) target = $region21
    $region20: #{tpu_custom_call.1} parent=1 // pred_region
      _
    $region21: #{tpu_custom_call.1} parent=1 // pred_fallthru
      _
    // Predicated region
    $region22: #{tpu_custom_call.1} parent=1 // pred_check
      _
    $region23: #{tpu_custom_call.1} parent=1 // pred_check_branch
      %25 = sbr.rel (0) target = $region25
    $region24: #{tpu_custom_call.1} parent=1 // pred_region
      _
    $region25: #{tpu_custom_call.1} parent=1 // pred_fallthru
      _
    // Predicated region
    $region26: #{tpu_custom_call.1} parent=1 // pred_check
      _
    $region27: #{tpu_custom_call.1} parent=1 // pred_check_branch
      %27 = sbr.rel (0) target = $region29
    $region28: #{tpu_custom_call.1} parent=1 // pred_region
      _
    $region29: #{tpu_custom_call.1} parent=1 // pred_fallthru
      _
    %v28 = vld [vmem:[%s0] sm:$0xff]
    %v29 = vld [vmem:[%s0 + $0x8] sm:$0xff]
    %v30 = vld [vmem:[%s0 + $0x10] sm:$0xff]
    %v31 = vld [vmem:[%s0 + $0x18] sm:$0xff]
    %v32 = vld [vmem:[%s0 + $0x20] sm:$0xff]
    %v33 = vld [vmem:[%s0 + $0x28] sm:$0xff]
    %v34 = vld [vmem:[%s0 + $0x30] sm:$0xff]
    %v35 = vld [vmem:[%s0 + $0x38] sm:$0xff]
    %v36 = vld [vmem:[%s0 + $0x40] sm:$0xff]
    %v37 = vld [vmem:[%s0 + $0x48] sm:$0xff]
    %v38 = vld [vmem:[%s0 + $0x50] sm:$0xff]
    %v39 = vld [vmem:[%s0 + $0x58] sm:$0xff]
    %v40 = vld [vmem:[%s0 + $0x60] sm:$0xff]
    %v41 = vld [vmem:[%s0 + $0x68] sm:$0xff]
    %v42 = vld [vmem:[%s0 + $0x70] sm:$0xff]
    %v43 = vld [vmem:[%s0 + $0x78] sm:$0xff]
    %v44 = vld [vmem:[%s1] sm:$0xff]
    %v45 = vld [vmem:[%s1 + $0x8] sm:$0xff]
    %v46 = vld [vmem:[%s1 + $0x10] sm:$0xff]
    %v47 = vld [vmem:[%s1 + $0x18] sm:$0xff]
    %v48 = vld [vmem:[%s1 + $0x20] sm:$0xff]
    %v49 = vld [vmem:[%s1 + $0x28] sm:$0xff]
    %v50 = vld [vmem:[%s1 + $0x30] sm:$0xff]
    %v51 = vld [vmem:[%s1 + $0x38] sm:$0xff]
    %v52 = vld [vmem:[%s2] sm:$0xff]
    %v53 = vld [vmem:[%s2 + $0x8] sm:$0xff]
    %v54 = vld [vmem:[%s2 + $0x10] sm:$0xff]
    %v55 = vld [vmem:[%s2 + $0x18] sm:$0xff]
    %v56 = vld [vmem:[%s2 + $0x20] sm:$0xff]
    %v57 = vld [vmem:[%s2 + $0x28] sm:$0xff]
    %v58 = vld [vmem:[%s2 + $0x30] sm:$0xff]
    %v59 = vld [vmem:[%s2 + $0x38] sm:$0xff]
    %61 = vset.pattern.permute.xlu0 0
    %62 = vperm.xlu0 %61, %v52
    %v63 = vpop.permute.xlu0 %62
    %66 = vset.pattern.permute.xlu0 0
    %67 = vperm.xlu0 %66, %v53
    %v68 = vpop.permute.xlu0 %67
    %71 = vset.pattern.permute.xlu0 0
    %72 = vperm.xlu0 %71, %v54
    %v73 = vpop.permute.xlu0 %72
    %76 = vset.pattern.permute.xlu0 0
    %77 = vperm.xlu0 %76, %v55
    %v78 = vpop.permute.xlu0 %77
    %81 = vset.pattern.permute.xlu0 0
    %82 = vperm.xlu0 %81, %v56
    %v83 = vpop.permute.xlu0 %82
    %86 = vset.pattern.permute.xlu0 0
    %87 = vperm.xlu0 %86, %v57
    %v88 = vpop.permute.xlu0 %87
    %91 = vset.pattern.permute.xlu0 0
    %92 = vperm.xlu0 %91, %v58
    %v93 = vpop.permute.xlu0 %92
    %96 = vset.pattern.permute.xlu0 0
    %97 = vperm.xlu0 %96, %v59
    %v98 = vpop.permute.xlu0 %97
    %vm100 = vcmask 261120
    %v102 = vsel %vm100, %v44, 0
    %v105 = vsel %vm100, %v45, 0
    %v108 = vsel %vm100, %v46, 0
    %v111 = vsel %vm100, %v47, 0
    %v114 = vsel %vm100, %v48, 0
    %v117 = vsel %vm100, %v49, 0
    %v120 = vsel %vm100, %v50, 0
    %v123 = vsel %vm100, %v51, 0
    %v126 = vsel %vm100, %v28, 0
    %v129 = vsel %vm100, %v29, 0
    %v132 = vsel %vm100, %v30, 0
    %v135 = vsel %vm100, %v31, 0
    %v138 = vsel %vm100, %v32, 0
    %v141 = vsel %vm100, %v33, 0
    %v144 = vsel %vm100, %v34, 0
    %v147 = vsel %vm100, %v35, 0
    %v150 = vsel %vm100, %v36, 0
    %v153 = vsel %vm100, %v37, 0
    %v156 = vsel %vm100, %v38, 0
    %v159 = vsel %vm100, %v39, 0
    %v162 = vsel %vm100, %v40, 0
    %v165 = vsel %vm100, %v41, 0
    %v168 = vsel %vm100, %v42, 0
    %v171 = vsel %vm100, %v43, 0
    %173 = vmatprep.subr.mxu0 0.0
    %174 = vmatpush1.xpose.msra.mxu0 %v126
    %175 = vmatprep.subr.mxu0 0.0
    %176 = vmatpush1.xpose.msra.mxu0 %v129
    %177 = vmatprep.subr.mxu0 0.0
    %178 = vmatpush1.xpose.msra.mxu0 %v132
    %179 = vmatprep.subr.mxu0 0.0
    %180 = vmatpush1.xpose.msra.mxu0 %v135
    %181 = vmatprep.subr.mxu0 0.0
    %182 = vmatpush1.xpose.msra.mxu0 %v138
    %183 = vmatprep.subr.mxu0 0.0
    %184 = vmatpush1.xpose.msra.mxu0 %v141
    %185 = vmatprep.subr.mxu0 0.0
    %186 = vmatpush1.xpose.msra.mxu0 %v144
    %187 = vmatprep.subr.mxu0 0.0
    %188 = vmatpush1.xpose.msra.mxu0 %v147
    %189 = vmatprep.subr.mxu0 0.0
    %190 = vmatpush1.xpose.msra.mxu0 %v150
    %191 = vmatprep.subr.mxu0 0.0
    %192 = vmatpush1.xpose.msra.mxu0 %v153
    %193 = vmatprep.subr.mxu0 0.0
    %194 = vmatpush1.xpose.msra.mxu0 %v156
    %195 = vmatprep.subr.mxu0 0.0
    %196 = vmatpush1.xpose.msra.mxu0 %v159
    %197 = vmatprep.subr.mxu0 0.0
    %198 = vmatpush1.xpose.msra.mxu0 %v162
    %199 = vmatprep.subr.mxu0 0.0
    %200 = vmatpush1.xpose.msra.mxu0 %v165
    %201 = vmatprep.subr.mxu0 0.0
    %202 = vmatpush1.xpose.msra.mxu0 %v168
    %203 = vmatprep.subr.mxu0 0.0
    %204 = vmatpush1.xpose.msra.mxu0 %v171
    %205 = vmatprep.subr.mxu0 0.0
    %206 = vmatpush1.xpose.msra.mxu0 0.0
    %207 = vmatprep.subr.mxu0 0.0
    %208 = vmatpush1.xpose.msra.mxu0 0.0
    %209 = vmatprep.subr.mxu0 0.0
    %210 = vmatpush1.xpose.msra.mxu0 0.0
    %211 = vmatprep.subr.mxu0 0.0
    %212 = vmatpush1.xpose.msra.mxu0 0.0
    %213 = vmatprep.subr.mxu0 0.0
    %214 = vmatpush1.xpose.msra.mxu0 0.0
    %215 = vmatprep.subr.mxu0 0.0
    %216 = vmatpush1.xpose.msra.mxu0 0.0
    %217 = vmatprep.subr.mxu0 0.0
    %218 = vmatpush1.xpose.msra.mxu0 0.0
    %219 = vmatprep.subr.mxu0 0.0
    %220 = vmatpush1.xpose.msra.mxu0 0.0
    %221 = vmatprep.subr.mxu0 0.0
    %222 = vmatpush1.xpose.msra.mxu0 0.0
    %223 = vmatprep.subr.mxu0 0.0
    %224 = vmatpush1.xpose.msra.mxu0 0.0
    %225 = vmatprep.subr.mxu0 0.0
    %226 = vmatpush1.xpose.msra.mxu0 0.0
    %227 = vmatprep.subr.mxu0 0.0
    %228 = vmatpush1.xpose.msra.mxu0 0.0
    %229 = vmatprep.subr.mxu0 0.0
    %230 = vmatpush1.xpose.msra.mxu0 0.0
    %231 = vmatprep.subr.mxu0 0.0
    %232 = vmatpush1.xpose.msra.mxu0 0.0
    %233 = vmatprep.subr.mxu0 0.0
    %234 = vmatpush1.xpose.msra.mxu0 0.0
    %235 = vmatprep.subr.mxu0 0.0
    %236 = vmatpush1.xpose.msra.mxu0 0.0
    %237 = vmatprep.mubr.f32.mxu0 0.0
    %238 = vmatmul.mubr.f32.gmra.mrb[0].mxu0 %v102
    %v239 = vpop.f32.mrb[0].mxu0
    %v240 = vadd.f32 %v63, %v239
    %v241 = vpop.f32.mrb[0].mxu0
    %242 = vmatprep.mubr.f32.mxu0 0.0
    %243 = vmatmul.mubr.f32.gmra.mrb[0].mxu0 %v105
    %v244 = vpop.f32.mrb[0].mxu0
    %v245 = vadd.f32 %v68, %v244
    %v246 = vpop.f32.mrb[0].mxu0
    %247 = vmatprep.mubr.f32.mxu0 0.0
    %248 = vmatmul.mubr.f32.gmra.mrb[0].mxu0 %v108
    %v249 = vpop.f32.mrb[0].mxu0
    %v250 = vadd.f32 %v73, %v249
    %v251 = vpop.f32.mrb[0].mxu0
    %252 = vmatprep.mubr.f32.mxu0 0.0
    %253 = vmatmul.mubr.f32.gmra.mrb[0].mxu0 %v111
    %v254 = vpop.f32.mrb[0].mxu0
    %v255 = vadd.f32 %v78, %v254
    %v256 = vpop.f32.mrb[0].mxu0
    %257 = vmatprep.mubr.f32.mxu0 0.0
    %258 = vmatmul.mubr.f32.gmra.mrb[0].mxu0 %v114
    %v259 = vpop.f32.mrb[0].mxu0
    %v260 = vadd.f32 %v83, %v259
    %v261 = vpop.f32.mrb[0].mxu0
    %262 = vmatprep.mubr.f32.mxu0 0.0
    %263 = vmatmul.mubr.f32.gmra.mrb[0].mxu0 %v117
    %v264 = vpop.f32.mrb[0].mxu0
    %v265 = vadd.f32 %v88, %v264
    %v266 = vpop.f32.mrb[0].mxu0
    %267 = vmatprep.mubr.f32.mxu0 0.0
    %268 = vmatmul.mubr.f32.gmra.mrb[0].mxu0 %v120
    %v269 = vpop.f32.mrb[0].mxu0
    %v270 = vadd.f32 %v93, %v269
    %v271 = vpop.f32.mrb[0].mxu0
    %272 = vmatprep.mubr.f32.mxu0 0.0
    %273 = vmatmul.mubr.f32.gmra.mrb[0].mxu0 %v123
    %v274 = vpop.f32.mrb[0].mxu0
    %v275 = vadd.f32 %v98, %v274
    %v276 = vpop.f32.mrb[0].mxu0
    %277 = vdwg.mxu0
    %v278 = vtanh.pop %v240
    %v279 = vtanh.pop %v245
    %v280 = vtanh.pop %v250
    %v281 = vtanh.pop %v255
    %v282 = vtanh.pop %v260
    %v283 = vtanh.pop %v265
    %v284 = vtanh.pop %v270
    %v285 = vtanh.pop %v275
    %v286 = vld [vmem:[%s3] sm:$0xff]
    %v287 = vld [vmem:[%s3 + $0x8] sm:$0xff]
    %v288 = vld [vmem:[%s3 + $0x10] sm:$0xff]
    %v289 = vld [vmem:[%s3 + $0x18] sm:$0xff]
    %v290 = vld [vmem:[%s3 + $0x20] sm:$0xff]
    %v291 = vld [vmem:[%s3 + $0x28] sm:$0xff]
    %v292 = vld [vmem:[%s3 + $0x30] sm:$0xff]
    %v293 = vld [vmem:[%s3 + $0x38] sm:$0xff]
    %v294 = vld [vmem:[%s4] sm:$0xff]
    %v295 = vld [vmem:[%s4 + $0x8] sm:$0xff]
    %v296 = vld [vmem:[%s4 + $0x10] sm:$0xff]
    %v297 = vld [vmem:[%s4 + $0x18] sm:$0xff]
    %v298 = vld [vmem:[%s4 + $0x20] sm:$0xff]
    %v299 = vld [vmem:[%s4 + $0x28] sm:$0xff]
    %v300 = vld [vmem:[%s4 + $0x30] sm:$0xff]
    %v301 = vld [vmem:[%s4 + $0x38] sm:$0xff]
    %303 = vset.pattern.permute.xlu0 0
    %304 = vperm.xlu0 %303, %v294
    %v305 = vpop.permute.xlu0 %304
    %308 = vset.pattern.permute.xlu0 0
    %309 = vperm.xlu0 %308, %v295
    %v310 = vpop.permute.xlu0 %309
    %313 = vset.pattern.permute.xlu0 0
    %314 = vperm.xlu0 %313, %v296
    %v315 = vpop.permute.xlu0 %314
    %318 = vset.pattern.permute.xlu0 0
    %319 = vperm.xlu0 %318, %v297
    %v320 = vpop.permute.xlu0 %319
    %323 = vset.pattern.permute.xlu0 0
    %324 = vperm.xlu0 %323, %v298
    %v325 = vpop.permute.xlu0 %324
    %328 = vset.pattern.permute.xlu0 0
    %329 = vperm.xlu0 %328, %v299
    %v330 = vpop.permute.xlu0 %329
    %333 = vset.pattern.permute.xlu0 0
    %334 = vperm.xlu0 %333, %v300
    %v335 = vpop.permute.xlu0 %334
    %338 = vset.pattern.permute.xlu0 0
    %339 = vperm.xlu0 %338, %v301
    %v340 = vpop.permute.xlu0 %339
    %vm342 = vcmask 523264
    %v344 = vsel %vm342, %v286, 0
    %v347 = vsel %vm342, %v287, 0
    %v350 = vsel %vm342, %v288, 0
    %v353 = vsel %vm342, %v289, 0
    %v356 = vsel %vm342, %v290, 0
    %v359 = vsel %vm342, %v291, 0
    %v362 = vsel %vm342, %v292, 0
    %v365 = vsel %vm342, %v293, 0
    %367 = vmatprep.subr.mxu0 0.0
    %368 = vmatpush1.msra.mxu0 %v278
    %369 = vmatprep.subr.mxu0 0.0
    %370 = vmatpush1.msra.mxu0 %v279
    %371 = vmatprep.subr.mxu0 0.0
    %372 = vmatpush1.msra.mxu0 %v280
    %373 = vmatprep.subr.mxu0 0.0
    %374 = vmatpush1.msra.mxu0 %v281
    %375 = vmatprep.subr.mxu0 0.0
    %376 = vmatpush1.msra.mxu0 %v282
    %377 = vmatprep.subr.mxu0 0.0
    %378 = vmatpush1.msra.mxu0 %v283
    %379 = vmatprep.subr.mxu0 0.0
    %380 = vmatpush1.msra.mxu0 %v284
    %381 = vmatprep.subr.mxu0 0.0
    %382 = vmatpush1.msra.mxu0 %v285
    %383 = vmatprep.subr.mxu0 0.0
    %384 = vmatpush1.msra.mxu0 0.0
    %385 = vmatprep.subr.mxu0 0.0
    %386 = vmatpush1.msra.mxu0 0.0
    %387 = vmatprep.subr.mxu0 0.0
    %388 = vmatpush1.msra.mxu0 0.0
    %389 = vmatprep.subr.mxu0 0.0
    %390 = vmatpush1.msra.mxu0 0.0
    %391 = vmatprep.subr.mxu0 0.0
    %392 = vmatpush1.msra.mxu0 0.0
    %393 = vmatprep.subr.mxu0 0.0
    %394 = vmatpush1.msra.mxu0 0.0
    %395 = vmatprep.subr.mxu0 0.0
    %396 = vmatpush1.msra.mxu0 0.0
    %397 = vmatprep.subr.mxu0 0.0
    %398 = vmatpush1.msra.mxu0 0.0
    %399 = vmatprep.subr.mxu0 0.0
    %400 = vmatpush1.msra.mxu0 0.0
    %401 = vmatprep.subr.mxu0 0.0
    %402 = vmatpush1.msra.mxu0 0.0
    %403 = vmatprep.subr.mxu0 0.0
    %404 = vmatpush1.msra.mxu0 0.0
    %405 = vmatprep.subr.mxu0 0.0
    %406 = vmatpush1.msra.mxu0 0.0
    %407 = vmatprep.subr.mxu0 0.0
    %408 = vmatpush1.msra.mxu0 0.0
    %409 = vmatprep.subr.mxu0 0.0
    %410 = vmatpush1.msra.mxu0 0.0
    %411 = vmatprep.subr.mxu0 0.0
    %412 = vmatpush1.msra.mxu0 0.0
    %413 = vmatprep.subr.mxu0 0.0
    %414 = vmatpush1.msra.mxu0 0.0
    %415 = vmatprep.subr.mxu0 0.0
    %416 = vmatpush1.msra.mxu0 0.0
    %417 = vmatprep.subr.mxu0 0.0
    %418 = vmatpush1.msra.mxu0 0.0
    %419 = vmatprep.subr.mxu0 0.0
    %420 = vmatpush1.msra.mxu0 0.0
    %421 = vmatprep.subr.mxu0 0.0
    %422 = vmatpush1.msra.mxu0 0.0
    %423 = vmatprep.subr.mxu0 0.0
    %424 = vmatpush1.msra.mxu0 0.0
    %425 = vmatprep.subr.mxu0 0.0
    %426 = vmatpush1.msra.mxu0 0.0
    %427 = vmatprep.subr.mxu0 0.0
    %428 = vmatpush1.msra.mxu0 0.0
    %429 = vmatprep.subr.mxu0 0.0
    %430 = vmatpush1.msra.mxu0 0.0
    %431 = vmatprep.mubr.f32.mxu0 0.0
    %432 = vmatmul.mubr.f32.gmra.mrb[0].mxu0 %v344
    %v433 = vpop.f32.mrb[0].mxu0
    %v434 = vadd.f32 %v305, %v433
    %v435 = vpop.f32.mrb[0].mxu0
    %436 = vmatprep.mubr.f32.mxu0 0.0
    %437 = vmatmul.mubr.f32.gmra.mrb[0].mxu0 %v347
    %v438 = vpop.f32.mrb[0].mxu0
    %v439 = vadd.f32 %v310, %v438
    %v440 = vpop.f32.mrb[0].mxu0
    %441 = vmatprep.mubr.f32.mxu0 0.0
    %442 = vmatmul.mubr.f32.gmra.mrb[0].mxu0 %v350
    %v443 = vpop.f32.mrb[0].mxu0
    %v444 = vadd.f32 %v315, %v443
    %v445 = vpop.f32.mrb[0].mxu0
    %446 = vmatprep.mubr.f32.mxu0 0.0
    %447 = vmatmul.mubr.f32.gmra.mrb[0].mxu0 %v353
    %v448 = vpop.f32.mrb[0].mxu0
    %v449 = vadd.f32 %v320, %v448
    %v450 = vpop.f32.mrb[0].mxu0
    %451 = vmatprep.mubr.f32.mxu0 0.0
    %452 = vmatmul.mubr.f32.gmra.mrb[0].mxu0 %v356
    %v453 = vpop.f32.mrb[0].mxu0
    %v454 = vadd.f32 %v325, %v453
    %v455 = vpop.f32.mrb[0].mxu0
    %456 = vmatprep.mubr.f32.mxu0 0.0
    %457 = vmatmul.mubr.f32.gmra.mrb[0].mxu0 %v359
    %v458 = vpop.f32.mrb[0].mxu0
    %v459 = vadd.f32 %v330, %v458
    %v460 = vpop.f32.mrb[0].mxu0
    %461 = vmatprep.mubr.f32.mxu0 0.0
    %462 = vmatmul.mubr.f32.gmra.mrb[0].mxu0 %v362
    %v463 = vpop.f32.mrb[0].mxu0
    %v464 = vadd.f32 %v335, %v463
    %v465 = vpop.f32.mrb[0].mxu0
    %466 = vmatprep.mubr.f32.mxu0 0.0
    %467 = vmatmul.mubr.f32.gmra.mrb[0].mxu0 %v365
    %v468 = vpop.f32.mrb[0].mxu0
    %v469 = vadd.f32 %v340, %v468
    %v470 = vpop.f32.mrb[0].mxu0
    %471 = vdwg.mxu0
    %v472 = vtanh.pop %v434
    %v473 = vtanh.pop %v439
    %v474 = vtanh.pop %v444
    %v475 = vtanh.pop %v449
    %v476 = vtanh.pop %v454
    %v477 = vtanh.pop %v459
    %v478 = vtanh.pop %v464
    %v479 = vtanh.pop %v469
    %v480 = vld [vmem:[%s5] sm:$0x1]
    %s481 = sld [smem:[#allocation2]]
    %v482 = vstv %s481
    %v484 = vsel %vm342, %v480, 0
    %486 = vmatprep.subr.mxu0 0.0
    %487 = vmatpush1.msra.mxu0 %v472
    %488 = vmatprep.subr.mxu0 0.0
    %489 = vmatpush1.msra.mxu0 %v473
    %490 = vmatprep.subr.mxu0 0.0
    %491 = vmatpush1.msra.mxu0 %v474
    %492 = vmatprep.subr.mxu0 0.0
    %493 = vmatpush1.msra.mxu0 %v475
    %494 = vmatprep.subr.mxu0 0.0
    %495 = vmatpush1.msra.mxu0 %v476
    %496 = vmatprep.subr.mxu0 0.0
    %497 = vmatpush1.msra.mxu0 %v477
    %498 = vmatprep.subr.mxu0 0.0
    %499 = vmatpush1.msra.mxu0 %v478
    %500 = vmatprep.subr.mxu0 0.0
    %501 = vmatpush1.msra.mxu0 %v479
    %502 = vmatprep.subr.mxu0 0.0
    %503 = vmatpush1.msra.mxu0 0.0
    %504 = vmatprep.subr.mxu0 0.0
    %505 = vmatpush1.msra.mxu0 0.0
    %506 = vmatprep.subr.mxu0 0.0
    %507 = vmatpush1.msra.mxu0 0.0
    %508 = vmatprep.subr.mxu0 0.0
    %509 = vmatpush1.msra.mxu0 0.0
    %510 = vmatprep.subr.mxu0 0.0
    %511 = vmatpush1.msra.mxu0 0.0
    %512 = vmatprep.subr.mxu0 0.0
    %513 = vmatpush1.msra.mxu0 0.0
    %514 = vmatprep.subr.mxu0 0.0
    %515 = vmatpush1.msra.mxu0 0.0
    %516 = vmatprep.subr.mxu0 0.0
    %517 = vmatpush1.msra.mxu0 0.0
    %518 = vmatprep.subr.mxu0 0.0
    %519 = vmatpush1.msra.mxu0 0.0
    %520 = vmatprep.subr.mxu0 0.0
    %521 = vmatpush1.msra.mxu0 0.0
    %522 = vmatprep.subr.mxu0 0.0
    %523 = vmatpush1.msra.mxu0 0.0
    %524 = vmatprep.subr.mxu0 0.0
    %525 = vmatpush1.msra.mxu0 0.0
    %526 = vmatprep.subr.mxu0 0.0
    %527 = vmatpush1.msra.mxu0 0.0
    %528 = vmatprep.subr.mxu0 0.0
    %529 = vmatpush1.msra.mxu0 0.0
    %530 = vmatprep.subr.mxu0 0.0
    %531 = vmatpush1.msra.mxu0 0.0
    %532 = vmatprep.subr.mxu0 0.0
    %533 = vmatpush1.msra.mxu0 0.0
    %534 = vmatprep.subr.mxu0 0.0
    %535 = vmatpush1.msra.mxu0 0.0
    %536 = vmatprep.subr.mxu0 0.0
    %537 = vmatpush1.msra.mxu0 0.0
    %538 = vmatprep.subr.mxu0 0.0
    %539 = vmatpush1.msra.mxu0 0.0
    %540 = vmatprep.subr.mxu0 0.0
    %541 = vmatpush1.msra.mxu0 0.0
    %542 = vmatprep.subr.mxu0 0.0
    %543 = vmatpush1.msra.mxu0 0.0
    %544 = vmatprep.subr.mxu0 0.0
    %545 = vmatpush1.msra.mxu0 0.0
    %546 = vmatprep.subr.mxu0 0.0
    %547 = vmatpush1.msra.mxu0 0.0
    %548 = vmatprep.subr.mxu0 0.0
    %549 = vmatpush1.msra.mxu0 0.0
    %550 = vmatprep.mubr.f32.mxu0 0.0
    %551 = vmatmul.mubr.f32.gmra.mrb[0].mxu0 %v484
    %v552 = vpop.f32.mrb[0].mxu0
    %v553 = vadd.f32 %v482, %v552
    %v554 = vpop.f32.mrb[0].mxu0
    %555 = vdwg.mxu0
    %556 = vst [vmem:[#allocation3] sm:$0x1] %v553
    // Predicated region
    $region30: #{tpu_custom_call.1} parent=1 // pred_check
      _
    $region31: #{tpu_custom_call.1} parent=1 // pred_check_branch
      %558 = sbr.rel (0) target = $region33
    $region32: #{tpu_custom_call.1} parent=1 // pred_region
      %s560 = ssub.s32 16, 16
      %561 = vsyncadd [#allocation4], %s560
      %s563 = sshll.u32 [#allocation3], 4
      %s564 = int_to_ptr.vmem [resolvable:$true] %s563
      %566 = dma.vmem_to_hbm [thread:$0]  %s564, 16, %s7, [#allocation4]
    $region33: #{tpu_custom_call.1} parent=1 // pred_fallthru
      _
    // Predicated region
    $region34: #{tpu_custom_call.1} parent=1 // pred_check
      _
    $region35: #{tpu_custom_call.1} parent=1 // pred_check_branch
      %568 = sbr.rel (0) target = $region37
    $region36: #{tpu_custom_call.1} parent=1 // pred_region
      %569 = dma.done [#allocation4], 16
    $region37: #{tpu_custom_call.1} parent=1 // pred_fallthru
      _
    %570 = vsyncpa [#allocation4], 1

</llo_original>
